<compile_context>
chip_gen: v7x
topology: tpu7x:2x2x1
jax: 0.10.0
libtpu: 0.0.40
codegen_flags: <defaults>
</compile_context>

<pallas_src>
import jax
import jax.numpy as jnp
from jax import lax
from jax.experimental import pallas as pl
from jax.experimental.pallas import tpu as pltpu


def _round_up(x, m):
    return (x + m - 1) // m * m


def _vmem_capacity_bytes():
    """Detected per-core VMEM capacity; conservative (v7x) fallback."""
    try:
        return int(pltpu.get_tpu_info().vmem_capacity_bytes)
    except Exception:
        return 64 * 1024 * 1024


def _pick_seq_tile(S, B, H1, H2, L, budget_bytes):
    """Largest multiple-of-8 divisor of S fitting the per-step VMEM budget.

    Per-step cost model (bytes per (batch, seq) row, f32 lane-padded layout):
      x block  : D(=2) lanes pad to 128 -> 128*4 B, double-buffered
      out block: L lanes pad to 128 in VMEM -> 128*4 B, double-buffered
      h1 f32 + h1 bf16, h2 f32 + temp + h2 bf16, h3 f32 live intermediates.
    Among feasible tiles, prefer S//Ts >= 2 so a 2-TensorCore part (v7x) can
    shard the "parallel" grid axis.
    """
    def per_step(ts):
        row = (2 * 128 * 4                                  # x block (2 bufs)
               + 2 * _round_up(L, 128) * 4                  # out block (2 bufs)
               + _round_up(H1, 128) * (4 + 2)               # h1 f32 + bf16
               + _round_up(H2, 128) * (2 * 4 + 2)           # h2 f32, temp, bf16
               + _round_up(L, 128) * 4)                     # h3 f32
        return B * ts * row

    cands = sorted((ts for ts in range(8, S + 1, 8) if S % ts == 0),
                   reverse=True)
    feasible = [ts for ts in cands if per_step(ts) <= budget_bytes]
    multi = [ts for ts in feasible if S // ts >= 2]
    if multi:
        return multi[0]
    if feasible:
        return feasible[0]
    if cands:
        return cands[-1]          # smallest legal multiple-of-8 tile
    return S                      # full extent is always a legal block


def _bn_relu_bf16(h, gamma, beta, eps=1e-5):
    # PyTorch BatchNorm1d(sequence_length) in training mode on (B, Ts, C):
    # dim 1 (sequence) is the channel axis -> statistics over (batch, feature)
    # per sequence position, biased variance.  One-pass statistics
    # (var = E[h^2] - mean^2) save a full VPU pass over h; rsqrt goes to the
    # EUP slot; normalization collapses to a single scale/shift FMA.
    mean = jnp.mean(h, axis=(0, 2), keepdims=True)
    mean_sq = jnp.mean(h * h, axis=(0, 2), keepdims=True)
    var = jnp.maximum(mean_sq - mean * mean, 0.0)
    inv = lax.rsqrt(var + eps)
    scale = gamma * inv
    shift = beta - mean * scale
    y = h * scale + shift
    return jnp.maximum(y, 0.0).astype(jnp.bfloat16)


def gaze_encoder_kernel(x_ref, w1b1_ref, w2_ref, w3_ref, b23_ref, bnp_ref,
                        o_ref):
    B, Ts, D = x_ref.shape
    H1 = w1b1_ref.shape[1]
    H2 = w2_ref.shape[1]
    L = w3_ref.shape[1]

    x = x_ref[...]                                        # (B, Ts, D) f32

    # ---- fc1 on the VPU: K = D (=2) is a degenerate MXU contraction, so use
    # broadcast-FMAs.  w1b1 rows [0, D) are the scale-folded w1, row D is b1.
    h1 = x[:, :, 0:1] * w1b1_ref[0:1, :].reshape(1, 1, H1)
    for d in range(1, D):                                 # static unroll
        h1 = h1 + x[:, :, d:d + 1] * w1b1_ref[d:d + 1, :].reshape(1, 1, H1)
    h1 = h1 + w1b1_ref[D:D + 1, :].reshape(1, 1, H1)      # + b1

    # BN affine params for this sequence tile, packed as [g1, be1, g2, be2].
    g1 = bnp_ref[:, 0:1].reshape(1, Ts, 1)
    be1 = bnp_ref[:, 1:2].reshape(1, Ts, 1)
    g2 = bnp_ref[:, 2:3].reshape(1, Ts, 1)
    be2 = bnp_ref[:, 3:4].reshape(1, Ts, 1)

    h1 = _bn_relu_bf16(h1, g1, be1)                       # (B, Ts, H1) bf16

    # ---- fc2 -> bn2 -> relu2 (MXU, bf16 operands, f32 accumulation). ----
    h2 = jnp.dot(h1.reshape(B * Ts, H1), w2_ref[...],
                 preferred_element_type=jnp.float32)
    h2 = h2.reshape(B, Ts, H2) + b23_ref[0:1, 0:H2].reshape(1, 1, H2)
    h2 = _bn_relu_bf16(h2, g2, be2)                       # (B, Ts, H2) bf16

    # ---- fc3 (MXU); output stored at its true width (no lane padding in HBM).
    h3 = jnp.dot(h2.reshape(B * Ts, H2), w3_ref[...],
                 preferred_element_type=jnp.float32)
    h3 = h3.reshape(B, Ts, L) + b23_ref[0:1, H2:H2 + L].reshape(1, 1, L)
    o_ref[...] = h3


def gaze_encoder(x, params, screen_width=1920.0, screen_height=1080.0):
    """GazeEncoder forward.  x: (B, S, D) float32.  Returns (B, S, latent)."""
    B, S, D = x.shape
    assert D >= 2, "GazeEncoder.normalize expects >= 2 input channels (x, y)"
    H1 = params["w1"].shape[1]
    H2 = params["w2"].shape[1]
    L = params["w3"].shape[1]

    # Fold the screen normalization into w1: (x * scale) @ w1 == x @ (scale * w1).
    scale = jnp.ones((D, 1), jnp.float32)
    scale = scale.at[0, 0].set(1.0 / screen_width)
    scale = scale.at[1, 0].set(1.0 / screen_height)
    w1 = params["w1"].astype(jnp.float32) * scale                     # (D, H1)
    w1b1 = jnp.concatenate([w1, params["b1"].reshape(1, H1)], axis=0)  # (D+1,H1)

    # fc2/fc3 run on the MXU with bf16 operands (f32 accumulation in-kernel).
    w2 = params["w2"].astype(jnp.bfloat16)                            # (H1, H2)
    w3 = params["w3"].astype(jnp.bfloat16)                            # (H2, L)

    # Pack remaining biases into one input: [b2 | b3].
    b23 = jnp.concatenate([params["b2"].reshape(1, H2),
                           params["b3"].reshape(1, L)], axis=1)       # (1, H2+L)

    # Pack BN affine params as (S, 4) columns = [g1, be1, g2, be2].
    bnp = jnp.concatenate(
        [params["g1"].reshape(S, 1), params["be1"].reshape(S, 1),
         params["g2"].reshape(S, 1), params["be2"].reshape(S, 1)], axis=1)

    # Generation-aware VMEM budget: 75% of detected capacity, capped at
    # 112 MiB (128 MiB parts) and floored at 32 MiB; tiles target <= 50% of it.
    vmem_cap = _vmem_capacity_bytes()
    vmem_limit = max(32 * 1024 * 1024,
                     min(vmem_cap * 3 // 4, 112 * 1024 * 1024))
    Ts = _pick_seq_tile(S, B, H1, H2, L, budget_bytes=vmem_limit // 2)
    grid = (S // Ts,)

    out = pl.pallas_call(
        gaze_encoder_kernel,
        out_shape=jax.ShapeDtypeStruct((B, S, L), jnp.float32),
        grid_spec=pltpu.PrefetchScalarGridSpec(
            num_scalar_prefetch=0,
            grid=grid,
            in_specs=[
                # x: tiled along S; batch stays fully resident so the per-
                # position BatchNorm statistics remain exact.
                pl.BlockSpec((B, Ts, D), lambda s: (0, s, 0)),
                # Weights / biases: resident across all grid steps (constant
                # index maps -> no per-step re-DMA).
                pl.BlockSpec((D + 1, H1), lambda s: (0, 0)),
                pl.BlockSpec((H1, H2), lambda s: (0, 0)),
                pl.BlockSpec((H2, L), lambda s: (0, 0)),
                pl.BlockSpec((1, H2 + L), lambda s: (0, 0)),
                # BN params: tiled along S together with x.
                pl.BlockSpec((Ts, 4), lambda s: (s, 0)),
            ],
            out_specs=pl.BlockSpec((B, Ts, L), lambda s: (0, s, 0)),
        ),
        compiler_params=pltpu.CompilerParams(
            dimension_semantics=("parallel",),
            vmem_limit_bytes=vmem_limit,
        ),
    )(x, w1b1, w2, w3, b23, bnp)

    return out


def init_params(key, input_dim, latent_dim, sequence_length):
    ks = jax.random.split(key, 6)

    def w(k, shape):
        return (0.1 * jax.random.normal(k, shape)).astype(jnp.float32)

    return {
        # Linear weights stored as (in, out); biases as (1, out).
        "w1": w(ks[0], (input_dim, 64)),
        "b1": w(ks[1], (1, 64)),
        "w2": w(ks[2], (64, 256)),
        "b2": w(ks[3], (1, 256)),
        "w3": w(ks[4], (256, latent_dim)),
        "b3": w(ks[5], (1, latent_dim)),
        # BatchNorm affine params (per sequence position), PyTorch default init.
        "g1": jnp.ones((sequence_length, 1), jnp.float32),
        "be1": jnp.zeros((sequence_length, 1), jnp.float32),
        "g2": jnp.ones((sequence_length, 1), jnp.float32),
        "be2": jnp.zeros((sequence_length, 1), jnp.float32),
    }


def gaze_encoder_ref(x, params, screen_width=1920.0, screen_height=1080.0):
    # Pure-JAX f32 reference mirroring the PyTorch forward (training-mode BN).
    x = x.at[:, :, 0].divide(screen_width)
    x = x.at[:, :, 1].divide(screen_height)

    def bn(h, g, b):
        m = jnp.mean(h, axis=(0, 2), keepdims=True)
        v = jnp.mean(jnp.square(h - m), axis=(0, 2), keepdims=True)
        return g.reshape(1, -1, 1) * (h - m) / jnp.sqrt(v + 1e-5) + b.reshape(1, -1, 1)

    h = x @ params["w1"] + params["b1"]
    h = jnp.maximum(bn(h, params["g1"], params["be1"]), 0.0)
    h = h @ params["w2"] + params["b2"]
    h = jnp.maximum(bn(h, params["g2"], params["be2"]), 0.0)
    return h @ params["w3"] + params["b3"]


if __name__ == "__main__":
    B, S, D, LAT = 2, 8, 2, 32  # batch, sequence_length, input_dim, latent_dim

    key = jax.random.PRNGKey(0)
    k_x, k_p = jax.random.split(key)
    # Gaze coordinates roughly in screen pixel range.
    x = jax.random.uniform(k_x, (B, S, D), jnp.float32,
                           minval=0.0, maxval=1080.0)
    params = init_params(k_p, D, LAT, S)

    out = gaze_encoder(x, params)
    out = jax.block_until_ready(out)

    ref = gaze_encoder_ref(x, params)
    assert out.shape == (B, S, LAT)
    # fc2/fc3 operands are bf16 on the MXU (f32 accumulation), so compare to
    # the pure-f32 reference with a bf16-operand-sized tolerance.
    max_err = float(jnp.max(jnp.abs(out - ref)))
    assert jnp.allclose(out, ref, atol=3e-2, rtol=3e-2), (
        f"mismatch vs reference, max abs err = {max_err}")
    print("KERNEL_OK")
</pallas_src>

<mosaic_0001>
module attributes {stable_mosaic.version = 11 : i64} {
  func.func @gaze_encoder_kernel(%arg0: i32, %arg1: memref<2x8x2xf32, #tpu.memory_space<vmem>>, %arg2: memref<3x64xf32, #tpu.memory_space<vmem>>, %arg3: memref<64x256xbf16, #tpu.memory_space<vmem>>, %arg4: memref<256x32xbf16, #tpu.memory_space<vmem>>, %arg5: memref<1x288xf32, #tpu.memory_space<vmem>>, %arg6: memref<8x4xf32, #tpu.memory_space<vmem>>, %arg7: memref<2x8x32xf32, #tpu.memory_space<vmem>>) attributes {dimension_semantics = [#tpu.dimension_semantics<parallel>], iteration_bounds = array<i64: 1>, scalar_prefetch = 0 : i64, scratch_operands = 0 : i64, tpu.core_type = #tpu.core_type<tc>, window_params = [{transform_indices = @transform_0, window_bounds = array<i64: 2, 8, 2>}, {pipeline_mode = #tpu.pipeline_mode<synchronous>, transform_indices = @transform_1, window_bounds = array<i64: 3, 64>}, {pipeline_mode = #tpu.pipeline_mode<synchronous>, transform_indices = @transform_2, window_bounds = array<i64: 64, 256>}, {pipeline_mode = #tpu.pipeline_mode<synchronous>, transform_indices = @transform_3, window_bounds = array<i64: 256, 32>}, {pipeline_mode = #tpu.pipeline_mode<synchronous>, transform_indices = @transform_4, window_bounds = array<i64: 1, 288>}, {transform_indices = @transform_5, window_bounds = array<i64: 8, 4>}, {transform_indices = @transform_6, window_bounds = array<i64: 2, 8, 32>}]} {
    %c0 = arith.constant 0 : index
    %c0_0 = arith.constant 0 : index
    %c0_1 = arith.constant 0 : index
    %0 = vector.load %arg1[%c0, %c0_0, %c0_1] : memref<2x8x2xf32, #tpu.memory_space<vmem>>, vector<2x8x2xf32>
    %1 = vector.extract_strided_slice %0 {offsets = [0, 0, 0], sizes = [2, 8, 1], strides = [1, 1, 1]} : vector<2x8x2xf32> to vector<2x8x1xf32>
    %c0_2 = arith.constant 0 : index
    %c0_3 = arith.constant 0 : index
    %2 = vector.load %arg2[%c0_2, %c0_3] : memref<3x64xf32, #tpu.memory_space<vmem>>, vector<1x64xf32>
    %3 = vector.shape_cast %2 : vector<1x64xf32> to vector<1x1x64xf32>
    %4 = vector.broadcast %1 : vector<2x8x1xf32> to vector<2x8x64xf32>
    %5 = vector.broadcast %3 : vector<1x1x64xf32> to vector<2x8x64xf32>
    %6 = arith.mulf %4, %5 : vector<2x8x64xf32>
    %7 = vector.extract_strided_slice %0 {offsets = [0, 0, 1], sizes = [2, 8, 1], strides = [1, 1, 1]} : vector<2x8x2xf32> to vector<2x8x1xf32>
    %c1 = arith.constant 1 : index
    %c0_4 = arith.constant 0 : index
    %8 = vector.load %arg2[%c1, %c0_4] : memref<3x64xf32, #tpu.memory_space<vmem>>, vector<1x64xf32>
    %9 = vector.shape_cast %8 : vector<1x64xf32> to vector<1x1x64xf32>
    %10 = vector.broadcast %7 : vector<2x8x1xf32> to vector<2x8x64xf32>
    %11 = vector.broadcast %9 : vector<1x1x64xf32> to vector<2x8x64xf32>
    %12 = arith.mulf %10, %11 : vector<2x8x64xf32>
    %13 = arith.addf %6, %12 : vector<2x8x64xf32>
    %c2 = arith.constant 2 : index
    %c0_5 = arith.constant 0 : index
    %14 = vector.load %arg2[%c2, %c0_5] : memref<3x64xf32, #tpu.memory_space<vmem>>, vector<1x64xf32>
    %15 = vector.shape_cast %14 : vector<1x64xf32> to vector<1x1x64xf32>
    %16 = vector.broadcast %15 : vector<1x1x64xf32> to vector<2x8x64xf32>
    %17 = arith.addf %13, %16 : vector<2x8x64xf32>
    %c0_6 = arith.constant 0 : index
    %c0_7 = arith.constant 0 : index
    %18 = vector.load %arg6[%c0_6, %c0_7] : memref<8x4xf32, #tpu.memory_space<vmem>>, vector<8x1xf32>
    %19 = vector.shape_cast %18 : vector<8x1xf32> to vector<1x8x1xf32>
    %c0_8 = arith.constant 0 : index
    %c1_9 = arith.constant 1 : index
    %20 = vector.load %arg6[%c0_8, %c1_9] : memref<8x4xf32, #tpu.memory_space<vmem>>, vector<8x1xf32>
    %21 = vector.shape_cast %20 : vector<8x1xf32> to vector<1x8x1xf32>
    %c0_10 = arith.constant 0 : index
    %c2_11 = arith.constant 2 : index
    %22 = vector.load %arg6[%c0_10, %c2_11] : memref<8x4xf32, #tpu.memory_space<vmem>>, vector<8x1xf32>
    %23 = vector.shape_cast %22 : vector<8x1xf32> to vector<1x8x1xf32>
    %c0_12 = arith.constant 0 : index
    %c3 = arith.constant 3 : index
    %24 = vector.load %arg6[%c0_12, %c3] : memref<8x4xf32, #tpu.memory_space<vmem>>, vector<8x1xf32>
    %25 = vector.shape_cast %24 : vector<8x1xf32> to vector<1x8x1xf32>
    %cst = arith.constant dense<0.000000e+00> : vector<8xf32>
    %26 = vector.multi_reduction <add>, %17, %cst [0, 2] : vector<2x8x64xf32> to vector<8xf32>
    %27 = vector.shape_cast %26 : vector<8xf32> to vector<1x8x1xf32>
    %cst_13 = arith.constant 1.280000e+02 : f32
    %28 = vector.broadcast %cst_13 : f32 to vector<1x8x1xf32>
    %29 = arith.divf %27, %28 : vector<1x8x1xf32>
    %30 = arith.mulf %17, %17 : vector<2x8x64xf32>
    %cst_14 = arith.constant dense<0.000000e+00> : vector<8xf32>
    %31 = vector.multi_reduction <add>, %30, %cst_14 [0, 2] : vector<2x8x64xf32> to vector<8xf32>
    %32 = vector.shape_cast %31 : vector<8xf32> to vector<1x8x1xf32>
    %cst_15 = arith.constant 1.280000e+02 : f32
    %33 = vector.broadcast %cst_15 : f32 to vector<1x8x1xf32>
    %34 = arith.divf %32, %33 : vector<1x8x1xf32>
    %35 = arith.mulf %29, %29 : vector<1x8x1xf32>
    %36 = arith.subf %34, %35 : vector<1x8x1xf32>
    %cst_16 = arith.constant 0.000000e+00 : f32
    %37 = vector.broadcast %cst_16 : f32 to vector<1x8x1xf32>
    %38 = arith.maximumf %36, %37 : vector<1x8x1xf32>
    %cst_17 = arith.constant 9.99999974E-6 : f32
    %39 = vector.broadcast %cst_17 : f32 to vector<1x8x1xf32>
    %40 = arith.addf %38, %39 : vector<1x8x1xf32>
    %41 = math.rsqrt %40 : vector<1x8x1xf32>
    %42 = arith.mulf %19, %41 : vector<1x8x1xf32>
    %43 = arith.mulf %29, %42 : vector<1x8x1xf32>
    %44 = arith.subf %21, %43 : vector<1x8x1xf32>
    %45 = vector.broadcast %42 : vector<1x8x1xf32> to vector<2x8x64xf32>
    %46 = arith.mulf %17, %45 : vector<2x8x64xf32>
    %47 = vector.broadcast %44 : vector<1x8x1xf32> to vector<2x8x64xf32>
    %48 = arith.addf %46, %47 : vector<2x8x64xf32>
    %cst_18 = arith.constant 0.000000e+00 : f32
    %49 = vector.broadcast %cst_18 : f32 to vector<2x8x64xf32>
    %50 = arith.maximumf %48, %49 : vector<2x8x64xf32>
    %51 = arith.truncf %50 : vector<2x8x64xf32> to vector<2x8x64xbf16>
    %52 = vector.shape_cast %51 : vector<2x8x64xbf16> to vector<16x64xbf16>
    %c0_19 = arith.constant 0 : index
    %c0_20 = arith.constant 0 : index
    %53 = vector.load %arg3[%c0_19, %c0_20] : memref<64x256xbf16, #tpu.memory_space<vmem>>, vector<64x256xbf16>
    %cst_21 = arith.constant dense<0.000000e+00> : vector<16x256xf32>
    %54 = tpu.matmul %52, %53, %cst_21 {dimension_numbers = #tpu.dot_dimension_numbers<[1], [0], [0], [1], [0, 0, 1, 1], [], []>} : vector<16x64xbf16>, vector<64x256xbf16>, vector<16x256xf32> -> vector<16x256xf32>
    %55 = vector.shape_cast %54 : vector<16x256xf32> to vector<2x8x256xf32>
    %c0_22 = arith.constant 0 : index
    %c0_23 = arith.constant 0 : index
    %56 = vector.load %arg5[%c0_22, %c0_23] : memref<1x288xf32, #tpu.memory_space<vmem>>, vector<1x256xf32>
    %57 = vector.shape_cast %56 : vector<1x256xf32> to vector<1x1x256xf32>
    %58 = vector.broadcast %57 : vector<1x1x256xf32> to vector<2x8x256xf32>
    %59 = arith.addf %55, %58 : vector<2x8x256xf32>
    %cst_24 = arith.constant dense<0.000000e+00> : vector<8xf32>
    %60 = vector.multi_reduction <add>, %59, %cst_24 [0, 2] : vector<2x8x256xf32> to vector<8xf32>
    %61 = vector.shape_cast %60 : vector<8xf32> to vector<1x8x1xf32>
    %cst_25 = arith.constant 5.120000e+02 : f32
    %62 = vector.broadcast %cst_25 : f32 to vector<1x8x1xf32>
    %63 = arith.divf %61, %62 : vector<1x8x1xf32>
    %64 = arith.mulf %59, %59 : vector<2x8x256xf32>
    %cst_26 = arith.constant dense<0.000000e+00> : vector<8xf32>
    %65 = vector.multi_reduction <add>, %64, %cst_26 [0, 2] : vector<2x8x256xf32> to vector<8xf32>
    %66 = vector.shape_cast %65 : vector<8xf32> to vector<1x8x1xf32>
    %cst_27 = arith.constant 5.120000e+02 : f32
    %67 = vector.broadcast %cst_27 : f32 to vector<1x8x1xf32>
    %68 = arith.divf %66, %67 : vector<1x8x1xf32>
    %69 = arith.mulf %63, %63 : vector<1x8x1xf32>
    %70 = arith.subf %68, %69 : vector<1x8x1xf32>
    %cst_28 = arith.constant 0.000000e+00 : f32
    %71 = vector.broadcast %cst_28 : f32 to vector<1x8x1xf32>
    %72 = arith.maximumf %70, %71 : vector<1x8x1xf32>
    %cst_29 = arith.constant 9.99999974E-6 : f32
    %73 = vector.broadcast %cst_29 : f32 to vector<1x8x1xf32>
    %74 = arith.addf %72, %73 : vector<1x8x1xf32>
    %75 = math.rsqrt %74 : vector<1x8x1xf32>
    %76 = arith.mulf %23, %75 : vector<1x8x1xf32>
    %77 = arith.mulf %63, %76 : vector<1x8x1xf32>
    %78 = arith.subf %25, %77 : vector<1x8x1xf32>
    %79 = vector.broadcast %76 : vector<1x8x1xf32> to vector<2x8x256xf32>
    %80 = arith.mulf %59, %79 : vector<2x8x256xf32>
    %81 = vector.broadcast %78 : vector<1x8x1xf32> to vector<2x8x256xf32>
    %82 = arith.addf %80, %81 : vector<2x8x256xf32>
    %cst_30 = arith.constant 0.000000e+00 : f32
    %83 = vector.broadcast %cst_30 : f32 to vector<2x8x256xf32>
    %84 = arith.maximumf %82, %83 : vector<2x8x256xf32>
    %85 = arith.truncf %84 : vector<2x8x256xf32> to vector<2x8x256xbf16>
    %86 = vector.shape_cast %85 : vector<2x8x256xbf16> to vector<16x256xbf16>
    %c0_31 = arith.constant 0 : index
    %c0_32 = arith.constant 0 : index
    %87 = vector.load %arg4[%c0_31, %c0_32] : memref<256x32xbf16, #tpu.memory_space<vmem>>, vector<256x32xbf16>
    %cst_33 = arith.constant dense<0.000000e+00> : vector<16x32xf32>
    %88 = tpu.matmul %86, %87, %cst_33 {dimension_numbers = #tpu.dot_dimension_numbers<[1], [0], [0], [1], [0, 0, 1, 1], [], []>} : vector<16x256xbf16>, vector<256x32xbf16>, vector<16x32xf32> -> vector<16x32xf32>
    %89 = vector.shape_cast %88 : vector<16x32xf32> to vector<2x8x32xf32>
    %c0_34 = arith.constant 0 : index
    %c256 = arith.constant 256 : index
    %90 = vector.load %arg5[%c0_34, %c256] : memref<1x288xf32, #tpu.memory_space<vmem>>, vector<1x32xf32>
    %91 = vector.shape_cast %90 : vector<1x32xf32> to vector<1x1x32xf32>
    %92 = vector.broadcast %91 : vector<1x1x32xf32> to vector<2x8x32xf32>
    %93 = arith.addf %89, %92 : vector<2x8x32xf32>
    %c0_35 = arith.constant 0 : index
    %c0_36 = arith.constant 0 : index
    %c0_37 = arith.constant 0 : index
    %94 = vector.load %arg7[%c0_35, %c0_36, %c0_37] : memref<2x8x32xf32, #tpu.memory_space<vmem>>, vector<2x8x32xf32>
    tpu.vector_store %arg7[%c0_35, %c0_36, %c0_37], %93 {strides = array<i32>} : memref<2x8x32xf32, #tpu.memory_space<vmem>>, vector<2x8x32xf32>,
    return
  }
  func.func @transform_0(%arg0: i32) -> (i32, i32, i32) {
    %c0_i32 = arith.constant 0 : i32
    %c0_i32_0 = arith.constant 0 : i32
    %c0_i32_1 = arith.constant 0 : i32
    return %c0_i32, %arg0, %c0_i32_0 : i32, i32, i32
  }
  func.func @transform_1(%arg0: i32) -> (i32, i32) {
    %c0_i32 = arith.constant 0 : i32
    %c0_i32_0 = arith.constant 0 : i32
    %c0_i32_1 = arith.constant 0 : i32
    return %c0_i32, %c0_i32_0 : i32, i32
  }
  func.func @transform_2(%arg0: i32) -> (i32, i32) {
    %c0_i32 = arith.constant 0 : i32
    %c0_i32_0 = arith.constant 0 : i32
    %c0_i32_1 = arith.constant 0 : i32
    return %c0_i32, %c0_i32_0 : i32, i32
  }
  func.func @transform_3(%arg0: i32) -> (i32, i32) {
    %c0_i32 = arith.constant 0 : i32
    %c0_i32_0 = arith.constant 0 : i32
    %c0_i32_1 = arith.constant 0 : i32
    return %c0_i32, %c0_i32_0 : i32, i32
  }
  func.func @transform_4(%arg0: i32) -> (i32, i32) {
    %c0_i32 = arith.constant 0 : i32
    %c0_i32_0 = arith.constant 0 : i32
    %c0_i32_1 = arith.constant 0 : i32
    return %c0_i32, %c0_i32_0 : i32, i32
  }
  func.func @transform_5(%arg0: i32) -> (i32, i32) {
    %c0_i32 = arith.constant 0 : i32
    %c0_i32_0 = arith.constant 0 : i32
    return %arg0, %c0_i32 : i32, i32
  }
  func.func @transform_6(%arg0: i32) -> (i32, i32, i32) {
    %c0_i32 = arith.constant 0 : i32
    %c0_i32_0 = arith.constant 0 : i32
    %c0_i32_1 = arith.constant 0 : i32
    return %c0_i32, %arg0, %c0_i32_0 : i32, i32, i32
  }
}

</mosaic_0001>

<llo_original>
// kernel: tpu_custom_call.1
$region0: #{tpu_custom_call.1}
  #allocation0 [shape = 'u32[]', space=smem, size = 0x4, offset = 0x4, fixed_abs, tag = 'smem constant byte address 0x4 - core index']
  #allocation1 [shape = 'u32[144,128]{1,0:T(1,128)}', space=vmem, size = 0x12000, scoped, tag = 'internal scratch']
  %s0 = inlined_call_operand.vmem [shape: f32[2,8,2], index: 0, kind: input, shape index: {}]
  %s1 = inlined_call_operand.vmem [shape: f32[3,64], index: 1, kind: input, shape index: {}]
  %s2 = inlined_call_operand.vmem [shape: bf16[64,256], index: 2, kind: input, shape index: {}]
  %s3 = inlined_call_operand.vmem [shape: bf16[256,32], index: 3, kind: input, shape index: {}]
  %s4 = inlined_call_operand.vmem [shape: f32[1,288], index: 4, kind: input, shape index: {}]
  %s5 = inlined_call_operand.vmem [shape: f32[8,4], index: 5, kind: input, shape index: {}]
  %s6 = inlined_call_operand.hbm [shape: f32[2,8,32], index: 6, kind: output, shape index: {}]
  %s7 = sld [smem:[#allocation0]]
  $region34: #{tpu_custom_call.1} parent=0
    _
  %s9 = ssub.s32 1, %s7
  %s10 = scalar_select 0, %s9, %s7
  $region1: #{tpu_custom_call.1} parent=0
    #allocation2 [shape = 'u8[8192]{0}', space=vmem, size = 0x2000, scoped, tag = 'output window, operand 0, single buffered']
    #allocation3 [shape = 's32[1]{0}', space=sflag, size = 0x4, scoped, tag = 'scoped memory for tpu_custom_call.1']
    %11 = vsyncpa [#allocation3], 0
    // Predicated region
    $region2: #{tpu_custom_call.1} parent=1 // pred_check
      _
    $region3: #{tpu_custom_call.1} parent=1 // pred_check_branch
      %13 = sbr.rel (0) target = $region5
    $region4: #{tpu_custom_call.1} parent=1 // pred_region
      _
    $region5: #{tpu_custom_call.1} parent=1 // pred_fallthru
      _
    // Predicated region
    $region6: #{tpu_custom_call.1} parent=1 // pred_check
      _
    $region7: #{tpu_custom_call.1} parent=1 // pred_check_branch
      %15 = sbr.rel (0) target = $region9
    $region8: #{tpu_custom_call.1} parent=1 // pred_region
      _
    $region9: #{tpu_custom_call.1} parent=1 // pred_fallthru
      _
    // Predicated region
    $region10: #{tpu_custom_call.1} parent=1 // pred_check
      _
    $region11: #{tpu_custom_call.1} parent=1 // pred_check_branch
      %17 = sbr.rel (0) target = $region13
    $region12: #{tpu_custom_call.1} parent=1 // pred_region
      _
    $region13: #{tpu_custom_call.1} parent=1 // pred_fallthru
      _
    // Predicated region
    $region14: #{tpu_custom_call.1} parent=1 // pred_check
      _
    $region15: #{tpu_custom_call.1} parent=1 // pred_check_branch
      %19 = sbr.rel (0) target = $region17
    $region16: #{tpu_custom_call.1} parent=1 // pred_region
      _
    $region17: #{tpu_custom_call.1} parent=1 // pred_fallthru
      _
    // Predicated region
    $region18: #{tpu_custom_call.1} parent=1 // pred_check
      _
    $region19: #{tpu_custom_call.1} parent=1 // pred_check_branch
      %21 = sbr.rel (0) target = $region21
    $region20: #{tpu_custom_call.1} parent=1 // pred_region
      _
    $region21: #{tpu_custom_call.1} parent=1 // pred_fallthru
      _
    // Predicated region
    $region22: #{tpu_custom_call.1} parent=1 // pred_check
      _
    $region23: #{tpu_custom_call.1} parent=1 // pred_check_branch
      %23 = sbr.rel (0) target = $region25
    $region24: #{tpu_custom_call.1} parent=1 // pred_region
      _
    $region25: #{tpu_custom_call.1} parent=1 // pred_fallthru
      _
    %v25 = vld [vmem:[%s0] sm:$0xff]
    %v26 = vld [vmem:[%s0 + $0x8] sm:$0xff]
    %v27 = vld [vmem:[%s1] sm:$0x1]
    %29 = vset.pattern.permute.xlu0 0
    %30 = vperm.xlu0 %29, %v25
    %v31 = vpop.permute.xlu0 %30
    %34 = vset.pattern.permute.xlu0 0
    %35 = vperm.xlu0 %34, %v26
    %v36 = vpop.permute.xlu0 %35
    %v38 = vlaneseq
    %v39 = vshrl.u32 %v38, 7
    %v40 = vsub.s32 0, %v39
    %v41 = vrot.slane %v27, %v40
    %v42 = vmul.f32 %v31, %v41
    %v43 = vmul.f32 %v36, %v41
    %v44 = vld [vmem:[%s1 + $0x1] sm:$0x1]
    %45 = vset.pattern.permute.xlu0 1
    %46 = vperm.xlu0 %45, %v25
    %v47 = vpop.permute.xlu0 %46
    %49 = vset.pattern.permute.xlu0 1
    %50 = vperm.xlu0 %49, %v26
    %v51 = vpop.permute.xlu0 %50
    %v53 = vlaneseq
    %v54 = vshrl.u32 %v53, 7
    %v55 = vsub.s32 0, %v54
    %v56 = vrot.slane %v44, %v55
    %v57 = vmul.f32 %v47, %v56
    %v58 = vmul.f32 %v51, %v56
    %v59 = vadd.f32 %v42, %v57
    %v60 = vadd.f32 %v43, %v58
    %v61 = vld [vmem:[%s1 + $0x2] sm:$0x1]
    %v62 = vlaneseq
    %v63 = vshrl.u32 %v62, 7
    %v64 = vsub.s32 0, %v63
    %v65 = vrot.slane %v61, %v64
    %v66 = vadd.f32 %v59, %v65
    %v67 = vadd.f32 %v60, %v65
    %v68 = vld [vmem:[%s5] sm:$0xff]
    %vm69 = vcmask 523264
    %v70 = vsel %vm69, %v66, 0.0
    %v71 = vsel %vm69, %v67, 0.0
    %v72 = vadd.f32 %v70, %v71
    %73 = vadd.xlane.f32.xlu0 %v72
    %v74 = vpop.xlane.xlu0 %73
    %v75 = vrcp.pop 128.0
    %v76 = vmul.f32 %v74, %v75
    %v77 = vmul.f32 %v66, %v66
    %v78 = vmul.f32 %v67, %v67
    %v79 = vsel %vm69, %v77, 0.0
    %v80 = vsel %vm69, %v78, 0.0
    %v81 = vadd.f32 %v79, %v80
    %82 = vadd.xlane.f32.xlu0 %v81
    %v83 = vpop.xlane.xlu0 %82
    %v84 = vmul.f32 %v83, %v75
    %v85 = vmul.f32 %v76, %v76
    %v86 = vsub.f32 %v84, %v85
    %v87 = vmax.f32 %v86, 0.0
    %v88 = vadd.f32 %v87, 1e-05
    %v89 = vrsqrt.pop %v88
    %v90 = vmul.f32 %v68, %v89
    %v91 = vmul.f32 %v76, %v90
    %93 = vrot.lane.b32.xlu0 %v91, 1
    %v94 = vpop.permute.xlu0 %93
    %v96 = vsub.f32 %v68, %v94
    %98 = vset.pattern.permute.xlu0 0
    %99 = vperm.xlu0 %98, %v90
    %v100 = vpop.permute.xlu0 %99
    %v102 = vmul.f32 %v66, %v100
    %v103 = vmul.f32 %v67, %v100
    %105 = vset.pattern.permute.xlu0 1
    %106 = vperm.xlu0 %105, %v96
    %v107 = vpop.permute.xlu0 %106
    %v109 = vadd.f32 %v102, %v107
    %v110 = vadd.f32 %v103, %v107
    %v111 = vmax.f32 %v109, 0.0
    %v112 = vmax.f32 %v110, 0.0
    %v113 = vpack.c.bf16 %v111, %v111
    %v114 = vpack.c.bf16 %v112, %v112
    %v115 = vld [vmem:[%s2] sm:$0xff]
    %v116 = vld [vmem:[%s2 + $0x8] sm:$0xff]
    %v117 = vld [vmem:[%s2 + $0x10] sm:$0xff]
    %v118 = vld [vmem:[%s2 + $0x18] sm:$0xff]
    %v119 = vld [vmem:[%s2 + $0x20] sm:$0xff]
    %v120 = vld [vmem:[%s2 + $0x28] sm:$0xff]
    %v121 = vld [vmem:[%s2 + $0x30] sm:$0xff]
    %v122 = vld [vmem:[%s2 + $0x38] sm:$0xff]
    %v125 = vunpack.c.l.b16 %v113
    %v126 = vunpack.c.l.b16 %v114
    %v127 = vpack.c.b16 %v126, %v125
    %v136 = vunpack.c.l.b16 %v115
    %v137 = vunpack.c.h.b16 %v115
    %v138 = vunpack.c.l.b16 %v116
    %v139 = vunpack.c.h.b16 %v116
    %v140 = vunpack.c.l.b16 %v117
    %v141 = vunpack.c.h.b16 %v117
    %v142 = vunpack.c.l.b16 %v118
    %v143 = vunpack.c.h.b16 %v118
    %v144 = vunpack.c.l.b16 %v119
    %v145 = vunpack.c.h.b16 %v119
    %v146 = vunpack.c.l.b16 %v120
    %v147 = vunpack.c.h.b16 %v120
    %v148 = vunpack.c.l.b16 %v121
    %v149 = vunpack.c.h.b16 %v121
    %v150 = vunpack.c.l.b16 %v122
    %v151 = vunpack.c.h.b16 %v122
    %v152 = vpack.c.b16 %v138, %v136
    %v153 = vpack.c.b16 %v139, %v137
    %v154 = vpack.c.b16 %v142, %v140
    %v155 = vpack.c.b16 %v143, %v141
    %v156 = vpack.c.b16 %v146, %v144
    %v157 = vpack.c.b16 %v147, %v145
    %v158 = vpack.c.b16 %v150, %v148
    %v159 = vpack.c.b16 %v151, %v149
    %v169 = vsel %vm69, %v127, 0
    %171 = vmatprep.subr.bf16.mxu0 %v153
    %172 = vmatpush1.bf16.msra.mxu0 %v152
    %173 = vmatprep.subr.bf16.mxu0 %v155
    %174 = vmatpush1.bf16.msra.mxu0 %v154
    %175 = vmatprep.subr.bf16.mxu0 %v157
    %176 = vmatpush1.bf16.msra.mxu0 %v156
    %177 = vmatprep.subr.bf16.mxu0 %v159
    %178 = vmatpush1.bf16.msra.mxu0 %v158
    %179 = vmatprep.subr.bf16.mxu0 0
    %180 = vmatpush1.bf16.msra.mxu0 0
    %181 = vmatprep.subr.bf16.mxu0 0
    %182 = vmatpush1.bf16.msra.mxu0 0
    %183 = vmatprep.subr.bf16.mxu0 0
    %184 = vmatpush1.bf16.msra.mxu0 0
    %185 = vmatprep.subr.bf16.mxu0 0
    %186 = vmatpush1.bf16.msra.mxu0 0
    %187 = vmatprep.subr.bf16.mxu0 0
    %188 = vmatpush1.bf16.msra.mxu0 0
    %189 = vmatprep.subr.bf16.mxu0 0
    %190 = vmatpush1.bf16.msra.mxu0 0
    %191 = vmatprep.subr.bf16.mxu0 0
    %192 = vmatpush1.bf16.msra.mxu0 0
    %193 = vmatprep.subr.bf16.mxu0 0
    %194 = vmatpush1.bf16.msra.mxu0 0
    %195 = vmatprep.subr.bf16.mxu0 0
    %196 = vmatpush1.bf16.msra.mxu0 0
    %197 = vmatprep.subr.bf16.mxu0 0
    %198 = vmatpush1.bf16.msra.mxu0 0
    %199 = vmatprep.subr.bf16.mxu0 0
    %200 = vmatpush1.bf16.msra.mxu0 0
    %201 = vmatprep.subr.bf16.mxu0 0
    %202 = vmatpush1.bf16.msra.mxu0 0
    %203 = vmatprep.mubr.bf16.mxu0 0
    %204 = vmatmul.mubr.bf16.gmra.mrb[0].mxu0 %v169
    %v205 = vpop.f32.mrb[0].mxu0
    %v206 = vadd.f32 0.0, %v205
    %v207 = vpop.f32.mrb[0].mxu0
    %v208 = vadd.f32 0.0, %v207
    %v209 = vpop.f32.mrb[0].mxu0
    %v210 = vadd.f32 0.0, %v209
    %v211 = vpop.f32.mrb[0].mxu0
    %v212 = vadd.f32 0.0, %v211
    %213 = vdwg.mxu0
    %v214 = vld [vmem:[%s4] sm:$0x3]
    %v216 = vlaneseq
    %v217 = vshrl.u32 %v216, 7
    %v218 = vsub.s32 0, %v217
    %v219 = vrot.slane %v214, %v218
    %v220 = vlaneseq
    %v221 = vshrl.u32 %v220, 7
    %v222 = vsub.s32 1, %v221
    %v223 = vrot.slane %v214, %v222
    %v226 = vadd.f32 %v206, %v219
    %v227 = vadd.f32 %v208, %v223
    %v228 = vadd.f32 %v210, %v219
    %v229 = vadd.f32 %v212, %v223
    %v230 = vadd.f32 %v226, %v227
    %v231 = vadd.f32 %v230, %v228
    %v232 = vadd.f32 %v231, %v229
    %233 = vadd.xlane.f32.xlu0 %v232
    %v234 = vpop.xlane.xlu0 %233
    %v235 = vrcp.pop 512.0
    %v236 = vmul.f32 %v234, %v235
    %v237 = vmul.f32 %v226, %v226
    %v238 = vmul.f32 %v227, %v227
    %v239 = vmul.f32 %v228, %v228
    %v240 = vmul.f32 %v229, %v229
    %v241 = vadd.f32 %v237, %v238
    %v242 = vadd.f32 %v241, %v239
    %v243 = vadd.f32 %v242, %v240
    %244 = vadd.xlane.f32.xlu0 %v243
    %v245 = vpop.xlane.xlu0 %244
    %v246 = vmul.f32 %v245, %v235
    %v247 = vmul.f32 %v236, %v236
    %v248 = vsub.f32 %v246, %v247
    %v249 = vmax.f32 %v248, 0.0
    %v250 = vadd.f32 %v249, 1e-05
    %v251 = vrsqrt.pop %v250
    %v252 = vmul.f32 %v68, %v251
    %v253 = vmul.f32 %v236, %v252
    %255 = vrot.lane.b32.xlu0 %v253, 1
    %v256 = vpop.permute.xlu0 %255
    %v258 = vsub.f32 %v68, %v256
    %260 = vset.pattern.permute.xlu0 2
    %261 = vperm.xlu0 %260, %v252
    %v262 = vpop.permute.xlu0 %261
    %v264 = vmul.f32 %v226, %v262
    %v265 = vmul.f32 %v227, %v262
    %v266 = vmul.f32 %v228, %v262
    %v267 = vmul.f32 %v229, %v262
    %269 = vset.pattern.permute.xlu0 3
    %270 = vperm.xlu0 %269, %v258
    %v271 = vpop.permute.xlu0 %270
    %v273 = vadd.f32 %v264, %v271
    %v274 = vadd.f32 %v265, %v271
    %v275 = vadd.f32 %v266, %v271
    %v276 = vadd.f32 %v267, %v271
    %v277 = vmax.f32 %v273, 0.0
    %v278 = vmax.f32 %v274, 0.0
    %v279 = vmax.f32 %v275, 0.0
    %v280 = vmax.f32 %v276, 0.0
    %v281 = vpack.c.bf16 %v277, %v277
    %v282 = vpack.c.bf16 %v278, %v278
    %v283 = vpack.c.bf16 %v279, %v279
    %v284 = vpack.c.bf16 %v280, %v280
    %v289 = vunpack.c.l.b16 %v281
    %v290 = vunpack.c.l.b16 %v282
    %v291 = vunpack.c.l.b16 %v283
    %v292 = vunpack.c.l.b16 %v284
    %v293 = vld [vmem:[%s3] sm:$0xf]
    %v294 = vld [vmem:[%s3 + $0x4] sm:$0xf]
    %v295 = vld [vmem:[%s3 + $0x8] sm:$0xf]
    %v296 = vld [vmem:[%s3 + $0xc] sm:$0xf]
    %v297 = vld [vmem:[%s3 + $0x10] sm:$0xf]
    %v298 = vld [vmem:[%s3 + $0x14] sm:$0xf]
    %v299 = vld [vmem:[%s3 + $0x18] sm:$0xf]
    %v300 = vld [vmem:[%s3 + $0x1c] sm:$0xf]
    %v301 = vld [vmem:[%s3 + $0x20] sm:$0xf]
    %v302 = vld [vmem:[%s3 + $0x24] sm:$0xf]
    %v303 = vld [vmem:[%s3 + $0x28] sm:$0xf]
    %v304 = vld [vmem:[%s3 + $0x2c] sm:$0xf]
    %v305 = vld [vmem:[%s3 + $0x30] sm:$0xf]
    %v306 = vld [vmem:[%s3 + $0x34] sm:$0xf]
    %v307 = vld [vmem:[%s3 + $0x38] sm:$0xf]
    %v308 = vld [vmem:[%s3 + $0x3c] sm:$0xf]
    %v309 = vld [vmem:[%s3 + $0x40] sm:$0xf]
    %v310 = vld [vmem:[%s3 + $0x44] sm:$0xf]
    %v311 = vld [vmem:[%s3 + $0x48] sm:$0xf]
    %v312 = vld [vmem:[%s3 + $0x4c] sm:$0xf]
    %v313 = vld [vmem:[%s3 + $0x50] sm:$0xf]
    %v314 = vld [vmem:[%s3 + $0x54] sm:$0xf]
    %v315 = vld [vmem:[%s3 + $0x58] sm:$0xf]
    %v316 = vld [vmem:[%s3 + $0x5c] sm:$0xf]
    %v317 = vld [vmem:[%s3 + $0x60] sm:$0xf]
    %v318 = vld [vmem:[%s3 + $0x64] sm:$0xf]
    %v319 = vld [vmem:[%s3 + $0x68] sm:$0xf]
    %v320 = vld [vmem:[%s3 + $0x6c] sm:$0xf]
    %v321 = vld [vmem:[%s3 + $0x70] sm:$0xf]
    %v322 = vld [vmem:[%s3 + $0x74] sm:$0xf]
    %v323 = vld [vmem:[%s3 + $0x78] sm:$0xf]
    %v324 = vld [vmem:[%s3 + $0x7c] sm:$0xf]
    %v325 = vpack.c.b16 %v291, %v289
    %v326 = vpack.c.b16 %v292, %v290
    %v361 = vunpack.c.l.b16 %v293
    %v362 = vunpack.c.l.b16 %v294
    %v363 = vunpack.c.l.b16 %v295
    %v364 = vunpack.c.l.b16 %v296
    %v365 = vunpack.c.l.b16 %v297
    %v366 = vunpack.c.l.b16 %v298
    %v367 = vunpack.c.l.b16 %v299
    %v368 = vunpack.c.l.b16 %v300
    %v369 = vunpack.c.l.b16 %v301
    %v370 = vunpack.c.l.b16 %v302
    %v371 = vunpack.c.l.b16 %v303
    %v372 = vunpack.c.l.b16 %v304
    %v373 = vunpack.c.l.b16 %v305
    %v374 = vunpack.c.l.b16 %v306
    %v375 = vunpack.c.l.b16 %v307
    %v376 = vunpack.c.l.b16 %v308
    %v377 = vunpack.c.l.b16 %v309
    %v378 = vunpack.c.l.b16 %v310
    %v379 = vunpack.c.l.b16 %v311
    %v380 = vunpack.c.l.b16 %v312
    %v381 = vunpack.c.l.b16 %v313
    %v382 = vunpack.c.l.b16 %v314
    %v383 = vunpack.c.l.b16 %v315
    %v384 = vunpack.c.l.b16 %v316
    %v385 = vunpack.c.l.b16 %v317
    %v386 = vunpack.c.l.b16 %v318
    %v387 = vunpack.c.l.b16 %v319
    %v388 = vunpack.c.l.b16 %v320
    %v389 = vunpack.c.l.b16 %v321
    %v390 = vunpack.c.l.b16 %v322
    %v391 = vunpack.c.l.b16 %v323
    %v392 = vunpack.c.l.b16 %v324
    %v393 = vpack.c.b16 %v362, %v361
    %v394 = vpack.c.b16 %v364, %v363
    %v395 = vpack.c.b16 %v366, %v365
    %v396 = vpack.c.b16 %v368, %v367
    %v397 = vpack.c.b16 %v370, %v369
    %v398 = vpack.c.b16 %v372, %v371
    %v399 = vpack.c.b16 %v374, %v373
    %v400 = vpack.c.b16 %v376, %v375
    %v401 = vpack.c.b16 %v378, %v377
    %v402 = vpack.c.b16 %v380, %v379
    %v403 = vpack.c.b16 %v382, %v381
    %v404 = vpack.c.b16 %v384, %v383
    %v405 = vpack.c.b16 %v386, %v385
    %v406 = vpack.c.b16 %v388, %v387
    %v407 = vpack.c.b16 %v390, %v389
    %v408 = vpack.c.b16 %v392, %v391
    %425 = vmatprep.subr.bf16.mxu0 0
    %426 = vmatpush1.bf16.msra.mxu0 %v393
    %427 = vmatprep.subr.bf16.mxu0 0
    %428 = vmatpush1.bf16.msra.mxu0 %v394
    %429 = vmatprep.subr.bf16.mxu0 0
    %430 = vmatpush1.bf16.msra.mxu0 %v395
    %431 = vmatprep.subr.bf16.mxu0 0
    %432 = vmatpush1.bf16.msra.mxu0 %v396
    %433 = vmatprep.subr.bf16.mxu0 0
    %434 = vmatpush1.bf16.msra.mxu0 %v397
    %435 = vmatprep.subr.bf16.mxu0 0
    %436 = vmatpush1.bf16.msra.mxu0 %v398
    %437 = vmatprep.subr.bf16.mxu0 0
    %438 = vmatpush1.bf16.msra.mxu0 %v399
    %439 = vmatprep.subr.bf16.mxu0 0
    %440 = vmatpush1.bf16.msra.mxu0 %v400
    %441 = vmatprep.subr.bf16.mxu0 0
    %442 = vmatpush1.bf16.msra.mxu0 %v401
    %443 = vmatprep.subr.bf16.mxu0 0
    %444 = vmatpush1.bf16.msra.mxu0 %v402
    %445 = vmatprep.subr.bf16.mxu0 0
    %446 = vmatpush1.bf16.msra.mxu0 %v403
    %447 = vmatprep.subr.bf16.mxu0 0
    %448 = vmatpush1.bf16.msra.mxu0 %v404
    %449 = vmatprep.subr.bf16.mxu0 0
    %450 = vmatpush1.bf16.msra.mxu0 %v405
    %451 = vmatprep.subr.bf16.mxu0 0
    %452 = vmatpush1.bf16.msra.mxu0 %v406
    %453 = vmatprep.subr.bf16.mxu0 0
    %454 = vmatpush1.bf16.msra.mxu0 %v407
    %455 = vmatprep.subr.bf16.mxu0 0
    %456 = vmatpush1.bf16.msra.mxu0 %v408
    %457 = vmatprep.mubr.bf16.mxu0 %v326
    %458 = vmatmul.mubr.bf16.gmra.mrb[0].mxu0 %v325
    %v459 = vpop.f32.mrb[0].mxu0
    %v460 = vadd.f32 0.0, %v459
    %v461 = vpop.f32.mrb[0].mxu0
    %v462 = vpop.f32.mrb[0].mxu0
    %v463 = vadd.f32 0.0, %v462
    %v464 = vpop.f32.mrb[0].mxu0
    %465 = vdwg.mxu0
    %v466 = vld [vmem:[%s4 + $0x2] sm:$0x1]
    %v468 = vlaneseq
    %v469 = vshrl.u32 %v468, 7
    %v470 = vsub.s32 0, %v469
    %v471 = vrot.slane %v466, %v470
    %v473 = vadd.f32 %v460, %v471
    %v474 = vadd.f32 %v463, %v471
    %vm475 = vcmask 261120
    %476 = vst.msk [vmem:[#allocation2] sm:$0xff] %vm475, %v473
    %477 = vst.msk [vmem:[#allocation2 + $0x8] sm:$0xff] %vm475, %v474
    // Predicated region
    $region26: #{tpu_custom_call.1} parent=1 // pred_check
      _
    $region27: #{tpu_custom_call.1} parent=1 // pred_check_branch
      %479 = sbr.rel (0) target = $region29
    $region28: #{tpu_custom_call.1} parent=1 // pred_region
      %s481 = ssub.s32 256, 256
      %482 = vsyncadd [#allocation3], %s481
      %s483 = sshll.u32 [#allocation2], 4
      %s484 = int_to_ptr.vmem [resolvable:$true] %s483
      %489 = dma.vmem_to_hbm [thread:$0]  %s484, 256, %s6, [#allocation3], 128, 128, 8
    $region29: #{tpu_custom_call.1} parent=1 // pred_fallthru
      _
    // Predicated region
    $region30: #{tpu_custom_call.1} parent=1 // pred_check
      _
    $region31: #{tpu_custom_call.1} parent=1 // pred_check_branch
      %491 = sbr.rel (0) target = $region33
    $region32: #{tpu_custom_call.1} parent=1 // pred_region
      %492 = dma.done [#allocation3], 256
    $region33: #{tpu_custom_call.1} parent=1 // pred_fallthru
      _
    %493 = vsyncpa [#allocation3], 1

</llo_original>
